<compile_context>
chip_gen: v5e
topology: v5e:2x2
jax: 0.10.0
libtpu: 0.0.40
codegen_flags: <defaults>
</compile_context>

<pallas_src>
import math
import functools

import jax
import jax.numpy as jnp
import numpy as np
from jax.experimental import pallas as pl
from jax.experimental.pallas import tpu as pltpu


# ----------------------------------------------------------------------------
# Fused kernel: one program per (batch, period-block) slab.
# ----------------------------------------------------------------------------

def _adaptive_graph_kernel(x_ref, w_ref, o_ref, *, P, N, d_model, d_hidden, top_k):
    """x_ref: [1, P, N, d_model]   w_ref: [d_model, 2*d_hidden]   o_ref: [1, P, N, N]"""
    f32 = jnp.float32
    x = x_ref[0]          # [P, N, d_model]
    w = w_ref[...]        # [d_model, 2*d_hidden]  (resident in VMEM across the grid)

    flat_ok = (N % 8 == 0)                 # leading-dim reshapes stay sublane-aligned
    collapse = flat_ok and (P * N <= 128)  # whole batched graph matmul fits one MXU tile

    if flat_ok:
        # Fused projection for all periods: one [P*N, d_model] x [d_model, 2*dh] pass.
        x2 = x.reshape(P * N, d_model)                         # free (last dim unchanged)
        a = jnp.dot(x2, w, preferred_element_type=f32)         # [P*N, 2*d_hidden]
        a1 = a[:, :d_hidden]                                   # A1  (static lane slice)
        a2 = a[:, d_hidden:]                                   # A2
        if collapse:
            # One matmul for all periods: contract d_hidden of both operands
            # (= A1 @ A2^T, no transpose materialized).  The P diagonal NxN
            # blocks of the [P*N, P*N] result are the per-period graphs.
            full = jnp.einsum('nd,md->nm', a1, a2, preferred_element_type=f32)
            blocks = [full[p * N:(p + 1) * N, p * N:(p + 1) * N][None] for p in range(P)]
            s = blocks[0] if P == 1 else jnp.concatenate(blocks, axis=0)     # [P, N, N]
        else:
            a1 = a1.reshape(P, N, d_hidden)
            a2 = a2.reshape(P, N, d_hidden)
            s = jnp.einsum('pnd,pmd->pnm', a1, a2, preferred_element_type=f32)
    else:
        # Sublane-misaligned N: keep everything batched per period (no relayouts).
        a1_l, a2_l = [], []
        for p in range(P):
            ap = jnp.dot(x[p], w, preferred_element_type=f32)  # [N, 2*d_hidden]
            a1_l.append(ap[:, :d_hidden][None])
            a2_l.append(ap[:, d_hidden:][None])
        a1 = jnp.concatenate(a1_l, axis=0)
        a2 = jnp.concatenate(a2_l, axis=0)
        s = jnp.einsum('pnd,pmd->pnm', a1, a2, preferred_element_type=f32)

    s = jnp.maximum(s, 0.0)                                    # relu    [P, N, N]

    # ---- top_kf: keep entries >= the row's k-th largest value (ties kept) ----
    # Iterative k-th max: `top_k` passes of (row max, count multiplicity, mask).
    # The threshold keeps updating while fewer than top_k entries have been
    # consumed — this reproduces torch.topk's k-th value exactly, including
    # duplicate maxima, with only k lane-reduces per row (no O(N^3) intermediate).
    work = s
    thr = jnp.zeros((P, N, 1), f32)
    cum = jnp.zeros((P, N, 1), f32)
    for _ in range(top_k):                                     # static unroll (k is small)
        m = jnp.max(work, axis=-1, keepdims=True)
        hit = (work == m)
        thr = jnp.where(cum < float(top_k), m, thr)
        cum = cum + jnp.sum(hit.astype(f32), axis=-1, keepdims=True)
        work = jnp.where(hit, -jnp.inf, work)

    # One keep-mask, reused for zeroing and for the softmax numerator mask
    # (kept != 0  <=>  s >= thr and s > 0, since s >= 0 after relu).
    keep = jnp.logical_and(s >= thr, s > 0.0)
    kept = jnp.where(keep, s, 0.0)

    # ---- nozero_softmax along the last dim ----
    mx = jnp.max(kept, axis=-1, keepdims=True)                 # includes structural zeros
    e = jnp.exp(kept - mx) * keep.astype(f32)
    denom = jnp.sum(e, axis=-1, keepdims=True) + 1e-5
    r = pl.reciprocal(denom, approx=True)                      # EUP slot
    r = r * (2.0 - denom * r)                                  # one Newton step -> ~exact
    o_ref[0] = (e * r).astype(o_ref.dtype)


def adaptive_graph(c_input, weight, top_k, *, p_block=None):
    """c_input: [B, P, N, d_model], weight: [2, d_model, d_hidden_gm] -> [B, P, N, N]."""
    B, P, N, d_model = c_input.shape
    two, _, d_hidden = weight.shape
    assert two == 2 and top_k >= 1
    if p_block is None:
        p_block = P                      # fat block; lower this for huge P*N^2 on v7x
    assert P % p_block == 0

    # Fuse the two projection weights into a single lane-wider slab.
    w_both = jnp.concatenate([weight[0], weight[1]], axis=1)   # [d_model, 2*d_hidden]

    kern = functools.partial(_adaptive_graph_kernel, P=p_block, N=N,
                             d_model=d_model, d_hidden=d_hidden, top_k=top_k)
    return pl.pallas_call(
        kern,
        out_shape=jax.ShapeDtypeStruct((B, P, N, N), jnp.float32),
        grid=(B, P // p_block),
        in_specs=[
            pl.BlockSpec((1, p_block, N, d_model), lambda b, q: (b, q, 0, 0)),
            pl.BlockSpec((d_model, 2 * d_hidden), lambda b, q: (0, 0)),
        ],
        out_specs=pl.BlockSpec((1, p_block, N, N), lambda b, q: (b, q, 0, 0)),
        compiler_params=pltpu.CompilerParams(
            dimension_semantics=("parallel", "parallel")),     # megacore / v7x balance
    )(c_input, w_both)


# ----------------------------------------------------------------------------
# Pure-JAX reference (mirrors the PyTorch math) for the correctness check.
# ----------------------------------------------------------------------------

def _ref_adaptive_graph(c_input, weight, top_k):
    hi = jax.lax.Precision.HIGHEST
    A1 = jnp.matmul(c_input, weight[0], precision=hi)
    A2 = jnp.swapaxes(jnp.matmul(c_input, weight[1], precision=hi), 2, 3)
    g = jnp.matmul(A1, A2, precision=hi)
    g = jnp.maximum(g, 0.0)                                   # relu
    kth = jax.lax.top_k(g, top_k)[0][..., -1:]                # k-th largest per row
    g = jnp.where(g < kth, 0.0, g)                            # top_kf
    mask = (g != 0.0).astype(jnp.float32)                     # nozero_softmax
    mx = jnp.max(g, axis=-1, keepdims=True)
    e = jnp.exp(g - mx) * mask
    return e / (jnp.sum(e, axis=-1, keepdims=True) + 1e-5)


# ----------------------------------------------------------------------------
# Main
# ----------------------------------------------------------------------------

if __name__ == "__main__":
    B, P, N = 2, 4, 16
    d_model, d_hidden_gm, top_k = 32, 16, 4

    key = jax.random.PRNGKey(0)
    k1, k2 = jax.random.split(key)
    c_input = jax.random.normal(k1, (B, P, N, d_model), dtype=jnp.float32)
    # xavier_normal_-style init for the [2, d_model, d_hidden_gm] parameter
    std = math.sqrt(2.0 / (d_model + d_hidden_gm))
    weight = (std * jax.random.normal(k2, (2, d_model, d_hidden_gm))).astype(jnp.float32)

    out = adaptive_graph(c_input, weight, top_k)
    out = jax.block_until_ready(out)

    ref = _ref_adaptive_graph(c_input, weight, top_k)
    err = float(jnp.max(jnp.abs(out - ref)))
    assert out.shape == (B, P, N, N)
    assert np.isfinite(err) and err < 2e-3, f"mismatch vs reference: {err}"
    print("KERNEL_OK")
</pallas_src>

<mosaic_0001>
module attributes {stable_mosaic.version = 11 : i64} {
  func.func @_adaptive_graph_kernel(%arg0: i32, %arg1: i32, %arg2: memref<1x4x16x32xf32, #tpu.memory_space<vmem>>, %arg3: memref<32x32xf32, #tpu.memory_space<vmem>>, %arg4: memref<1x4x16x16xf32, #tpu.memory_space<vmem>>) attributes {dimension_semantics = [#tpu.dimension_semantics<parallel>, #tpu.dimension_semantics<parallel>], iteration_bounds = array<i64: 2, 1>, scalar_prefetch = 0 : i64, scratch_operands = 0 : i64, tpu.core_type = #tpu.core_type<tc>, window_params = [{transform_indices = @transform_0, window_bounds = array<i64: 1, 4, 16, 32>}, {pipeline_mode = #tpu.pipeline_mode<synchronous>, transform_indices = @transform_1, window_bounds = array<i64: 32, 32>}, {transform_indices = @transform_2, window_bounds = array<i64: 1, 4, 16, 16>}]} {
    %c0 = arith.constant 0 : index
    %c0_0 = arith.constant 0 : index
    %c0_1 = arith.constant 0 : index
    %c0_2 = arith.constant 0 : index
    %0 = vector.load %arg2[%c0, %c0_0, %c0_1, %c0_2] : memref<1x4x16x32xf32, #tpu.memory_space<vmem>>, vector<1x4x16x32xf32>
    %1 = vector.shape_cast %0 : vector<1x4x16x32xf32> to vector<4x16x32xf32>
    %c0_3 = arith.constant 0 : index
    %c0_4 = arith.constant 0 : index
    %2 = vector.load %arg3[%c0_3, %c0_4] : memref<32x32xf32, #tpu.memory_space<vmem>>, vector<32x32xf32>
    %3 = vector.shape_cast %1 : vector<4x16x32xf32> to vector<64x32xf32>
    %cst = arith.constant dense<0.000000e+00> : vector<64x32xf32>
    %4 = tpu.matmul %3, %2, %cst {dimension_numbers = #tpu.dot_dimension_numbers<[1], [0], [0], [1], [0, 0, 1, 1], [], []>} : vector<64x32xf32>, vector<32x32xf32>, vector<64x32xf32> -> vector<64x32xf32>
    %5 = vector.extract_strided_slice %4 {offsets = [0, 0], sizes = [64, 16], strides = [1, 1]} : vector<64x32xf32> to vector<64x16xf32>
    %6 = vector.extract_strided_slice %4 {offsets = [0, 16], sizes = [64, 16], strides = [1, 1]} : vector<64x32xf32> to vector<64x16xf32>
    "tpu.trace_start"() <{level = 10 : i32, message = "nd,md->nm"}> : () -> ()
    %cst_5 = arith.constant dense<0.000000e+00> : vector<64x64xf32>
    %7 = tpu.matmul %5, %6, %cst_5 {dimension_numbers = #tpu.dot_dimension_numbers<[1], [1], [0], [0], [0, 0, 1, 0], [], []>} : vector<64x16xf32>, vector<64x16xf32>, vector<64x64xf32> -> vector<64x64xf32>
    "tpu.trace_stop"() : () -> ()
    %8 = vector.extract_strided_slice %7 {offsets = [0, 0], sizes = [16, 16], strides = [1, 1]} : vector<64x64xf32> to vector<16x16xf32>
    %9 = vector.shape_cast %8 : vector<16x16xf32> to vector<1x16x16xf32>
    %10 = vector.extract_strided_slice %7 {offsets = [16, 16], sizes = [16, 16], strides = [1, 1]} : vector<64x64xf32> to vector<16x16xf32>
    %11 = vector.shape_cast %10 : vector<16x16xf32> to vector<1x16x16xf32>
    %12 = vector.extract_strided_slice %7 {offsets = [32, 32], sizes = [16, 16], strides = [1, 1]} : vector<64x64xf32> to vector<16x16xf32>
    %13 = vector.shape_cast %12 : vector<16x16xf32> to vector<1x16x16xf32>
    %14 = vector.extract_strided_slice %7 {offsets = [48, 48], sizes = [16, 16], strides = [1, 1]} : vector<64x64xf32> to vector<16x16xf32>
    %15 = vector.shape_cast %14 : vector<16x16xf32> to vector<1x16x16xf32>
    %16 = tpu.concatenate %9, %11, %13, %15 in 0 : vector<1x16x16xf32>, vector<1x16x16xf32>, vector<1x16x16xf32>, vector<1x16x16xf32> -> vector<4x16x16xf32>
    %cst_6 = arith.constant 0.000000e+00 : f32
    %17 = vector.broadcast %cst_6 : f32 to vector<4x16x16xf32>
    %18 = arith.maximumf %16, %17 : vector<4x16x16xf32>
    %cst_7 = arith.constant 0.000000e+00 : f32
    %19 = vector.broadcast %cst_7 : f32 to vector<4x16x1xf32>
    %cst_8 = arith.constant 0.000000e+00 : f32
    %20 = vector.broadcast %cst_8 : f32 to vector<4x16x1xf32>
    %cst_9 = arith.constant dense<0xFF800000> : vector<4x16xf32>
    %21 = vector.multi_reduction <maximumf>, %18, %cst_9 [2] : vector<4x16x16xf32> to vector<4x16xf32>
    %22 = vector.shape_cast %21 : vector<4x16xf32> to vector<4x16x1xf32>
    %23 = vector.broadcast %22 : vector<4x16x1xf32> to vector<4x16x16xf32>
    %24 = arith.cmpf oeq, %18, %23 : vector<4x16x16xf32>
    %cst_10 = arith.constant 4.000000e+00 : f32
    %25 = vector.broadcast %cst_10 : f32 to vector<4x16x1xf32>
    %26 = arith.cmpf olt, %20, %25 : vector<4x16x1xf32>
    %27 = arith.select %26, %22, %19 : vector<4x16x1xi1>, vector<4x16x1xf32>
    %28 = arith.extui %24 : vector<4x16x16xi1> to vector<4x16x16xi32>
    %29 = arith.sitofp %28 : vector<4x16x16xi32> to vector<4x16x16xf32>
    %cst_11 = arith.constant dense<0.000000e+00> : vector<4x16xf32>
    %30 = vector.multi_reduction <add>, %29, %cst_11 [2] : vector<4x16x16xf32> to vector<4x16xf32>
    %31 = vector.shape_cast %30 : vector<4x16xf32> to vector<4x16x1xf32>
    %32 = arith.addf %20, %31 : vector<4x16x1xf32>
    %cst_12 = arith.constant 0xFF800000 : f32
    %33 = vector.broadcast %cst_12 : f32 to vector<4x16x16xf32>
    %34 = arith.select %24, %33, %18 : vector<4x16x16xi1>, vector<4x16x16xf32>
    %cst_13 = arith.constant dense<0xFF800000> : vector<4x16xf32>
    %35 = vector.multi_reduction <maximumf>, %34, %cst_13 [2] : vector<4x16x16xf32> to vector<4x16xf32>
    %36 = vector.shape_cast %35 : vector<4x16xf32> to vector<4x16x1xf32>
    %37 = vector.broadcast %36 : vector<4x16x1xf32> to vector<4x16x16xf32>
    %38 = arith.cmpf oeq, %34, %37 : vector<4x16x16xf32>
    %cst_14 = arith.constant 4.000000e+00 : f32
    %39 = vector.broadcast %cst_14 : f32 to vector<4x16x1xf32>
    %40 = arith.cmpf olt, %32, %39 : vector<4x16x1xf32>
    %41 = arith.select %40, %36, %27 : vector<4x16x1xi1>, vector<4x16x1xf32>
    %42 = arith.extui %38 : vector<4x16x16xi1> to vector<4x16x16xi32>
    %43 = arith.sitofp %42 : vector<4x16x16xi32> to vector<4x16x16xf32>
    %cst_15 = arith.constant dense<0.000000e+00> : vector<4x16xf32>
    %44 = vector.multi_reduction <add>, %43, %cst_15 [2] : vector<4x16x16xf32> to vector<4x16xf32>
    %45 = vector.shape_cast %44 : vector<4x16xf32> to vector<4x16x1xf32>
    %46 = arith.addf %32, %45 : vector<4x16x1xf32>
    %cst_16 = arith.constant 0xFF800000 : f32
    %47 = vector.broadcast %cst_16 : f32 to vector<4x16x16xf32>
    %48 = arith.select %38, %47, %34 : vector<4x16x16xi1>, vector<4x16x16xf32>
    %cst_17 = arith.constant dense<0xFF800000> : vector<4x16xf32>
    %49 = vector.multi_reduction <maximumf>, %48, %cst_17 [2] : vector<4x16x16xf32> to vector<4x16xf32>
    %50 = vector.shape_cast %49 : vector<4x16xf32> to vector<4x16x1xf32>
    %51 = vector.broadcast %50 : vector<4x16x1xf32> to vector<4x16x16xf32>
    %52 = arith.cmpf oeq, %48, %51 : vector<4x16x16xf32>
    %cst_18 = arith.constant 4.000000e+00 : f32
    %53 = vector.broadcast %cst_18 : f32 to vector<4x16x1xf32>
    %54 = arith.cmpf olt, %46, %53 : vector<4x16x1xf32>
    %55 = arith.select %54, %50, %41 : vector<4x16x1xi1>, vector<4x16x1xf32>
    %56 = arith.extui %52 : vector<4x16x16xi1> to vector<4x16x16xi32>
    %57 = arith.sitofp %56 : vector<4x16x16xi32> to vector<4x16x16xf32>
    %cst_19 = arith.constant dense<0.000000e+00> : vector<4x16xf32>
    %58 = vector.multi_reduction <add>, %57, %cst_19 [2] : vector<4x16x16xf32> to vector<4x16xf32>
    %59 = vector.shape_cast %58 : vector<4x16xf32> to vector<4x16x1xf32>
    %60 = arith.addf %46, %59 : vector<4x16x1xf32>
    %cst_20 = arith.constant 0xFF800000 : f32
    %61 = vector.broadcast %cst_20 : f32 to vector<4x16x16xf32>
    %62 = arith.select %52, %61, %48 : vector<4x16x16xi1>, vector<4x16x16xf32>
    %cst_21 = arith.constant dense<0xFF800000> : vector<4x16xf32>
    %63 = vector.multi_reduction <maximumf>, %62, %cst_21 [2] : vector<4x16x16xf32> to vector<4x16xf32>
    %64 = vector.shape_cast %63 : vector<4x16xf32> to vector<4x16x1xf32>
    %cst_22 = arith.constant 4.000000e+00 : f32
    %65 = vector.broadcast %cst_22 : f32 to vector<4x16x1xf32>
    %66 = arith.cmpf olt, %60, %65 : vector<4x16x1xf32>
    %67 = arith.select %66, %64, %55 : vector<4x16x1xi1>, vector<4x16x1xf32>
    %68 = vector.broadcast %67 : vector<4x16x1xf32> to vector<4x16x16xf32>
    %69 = arith.cmpf oge, %18, %68 : vector<4x16x16xf32>
    %cst_23 = arith.constant 0.000000e+00 : f32
    %70 = vector.broadcast %cst_23 : f32 to vector<4x16x16xf32>
    %71 = arith.cmpf ogt, %18, %70 : vector<4x16x16xf32>
    %72 = arith.andi %69, %71 : vector<4x16x16xi1>
    %cst_24 = arith.constant 0.000000e+00 : f32
    %73 = vector.broadcast %cst_24 : f32 to vector<4x16x16xf32>
    %74 = arith.select %72, %18, %73 : vector<4x16x16xi1>, vector<4x16x16xf32>
    %cst_25 = arith.constant dense<0xFF800000> : vector<4x16xf32>
    %75 = vector.multi_reduction <maximumf>, %74, %cst_25 [2] : vector<4x16x16xf32> to vector<4x16xf32>
    %76 = vector.shape_cast %75 : vector<4x16xf32> to vector<4x16x1xf32>
    %77 = vector.broadcast %76 : vector<4x16x1xf32> to vector<4x16x16xf32>
    %78 = arith.subf %74, %77 : vector<4x16x16xf32>
    %79 = math.exp %78 : vector<4x16x16xf32>
    %80 = arith.extui %72 : vector<4x16x16xi1> to vector<4x16x16xi32>
    %81 = arith.sitofp %80 : vector<4x16x16xi32> to vector<4x16x16xf32>
    %82 = arith.mulf %79, %81 : vector<4x16x16xf32>
    %cst_26 = arith.constant dense<0.000000e+00> : vector<4x16xf32>
    %83 = vector.multi_reduction <add>, %82, %cst_26 [2] : vector<4x16x16xf32> to vector<4x16xf32>
    %84 = vector.shape_cast %83 : vector<4x16xf32> to vector<4x16x1xf32>
    %cst_27 = arith.constant 9.99999974E-6 : f32
    %85 = vector.broadcast %cst_27 : f32 to vector<4x16x1xf32>
    %86 = arith.addf %84, %85 : vector<4x16x1xf32>
    %87 = tpu.reciprocal %86 {approx = true} : vector<4x16x1xf32> -> vector<4x16x1xf32>
    %88 = arith.mulf %86, %87 : vector<4x16x1xf32>
    %cst_28 = arith.constant 2.000000e+00 : f32
    %89 = vector.broadcast %cst_28 : f32 to vector<4x16x1xf32>
    %90 = arith.subf %89, %88 : vector<4x16x1xf32>
    %91 = arith.mulf %87, %90 : vector<4x16x1xf32>
    %92 = vector.broadcast %91 : vector<4x16x1xf32> to vector<4x16x16xf32>
    %93 = arith.mulf %82, %92 : vector<4x16x16xf32>
    %c0_29 = arith.constant 0 : index
    %c0_30 = arith.constant 0 : index
    %c0_31 = arith.constant 0 : index
    %c0_32 = arith.constant 0 : index
    %94 = vector.load %arg4[%c0_29, %c0_30, %c0_31, %c0_32] : memref<1x4x16x16xf32, #tpu.memory_space<vmem>>, vector<1x4x16x16xf32>
    %95 = vector.shape_cast %94 : vector<1x4x16x16xf32> to vector<4x16x16xf32>
    %96 = vector.shape_cast %93 : vector<4x16x16xf32> to vector<1x4x16x16xf32>
    tpu.vector_store %arg4[%c0_29, %c0_30, %c0_31, %c0_32], %96 {strides = array<i32>} : memref<1x4x16x16xf32, #tpu.memory_space<vmem>>, vector<1x4x16x16xf32>,
    return
  }
  func.func @transform_0(%arg0: i32, %arg1: i32) -> (i32, i32, i32, i32) {
    %c0_i32 = arith.constant 0 : i32
    %c0_i32_0 = arith.constant 0 : i32
    %c0_i32_1 = arith.constant 0 : i32
    return %arg0, %arg1, %c0_i32, %c0_i32_0 : i32, i32, i32, i32
  }
  func.func @transform_1(%arg0: i32, %arg1: i32) -> (i32, i32) {
    %c0_i32 = arith.constant 0 : i32
    %c0_i32_0 = arith.constant 0 : i32
    %c0_i32_1 = arith.constant 0 : i32
    return %c0_i32, %c0_i32_0 : i32, i32
  }
  func.func @transform_2(%arg0: i32, %arg1: i32) -> (i32, i32, i32, i32) {
    %c0_i32 = arith.constant 0 : i32
    %c0_i32_0 = arith.constant 0 : i32
    %c0_i32_1 = arith.constant 0 : i32
    return %arg0, %arg1, %c0_i32, %c0_i32_0 : i32, i32, i32, i32
  }
}

</mosaic_0001>

<llo_original>
// kernel: tpu_custom_call.1
$region0: #{tpu_custom_call.1}
  #allocation0 [shape = 'u32[]', space=smem, size = 0x4, offset = 0x4, fixed_abs, tag = 'smem constant byte address 0x4 - core index']
  #allocation1 [shape = 'u32[72,128]{1,0:T(1,128)}', space=vmem, size = 0x9000, scoped, tag = 'internal scratch']
  %s0 = inlined_call_operand.hbm [shape: f32[2,4,16,32], index: 0, kind: input, shape index: {}]
  %s1 = inlined_call_operand.hbm [shape: f32[32,32], index: 1, kind: input, shape index: {}]
  %s2 = inlined_call_operand.hbm [shape: f32[2,4,16,16], index: 2, kind: output, shape index: {}]
  %s3 = sld [smem:[#allocation0]]
  $region49: #{tpu_custom_call.1} parent=0
    _
  %s5 = ssub.s32 1, %s3
  %s6 = scalar_select 0, %s5, %s3
  $region1: #{tpu_custom_call.1} parent=0
    #allocation2 [shape = 'u8[65536]{0}', space=vmem, size = 0x10000, scoped, tag = 'input window, operand 0']
    #allocation3 [shape = 's32[2]{0}', space=sflag, size = 0x8, scoped, tag = 'scoped memory for tpu_custom_call.1']
    #allocation4 [shape = 's32[2]{0}', space=sflag, size = 0x8, scoped, tag = 'scoped memory for tpu_custom_call.1']
    #allocation5 [shape = 'u8[16384]{0}', space=vmem, size = 0x4000, scoped, tag = 'input window, operand 1, single buffered']
    #allocation6 [shape = 's32[1]{0}', space=sflag, size = 0x4, scoped, tag = 'scoped memory for tpu_custom_call.1']
    #allocation7 [shape = 'u8[65536]{0}', space=vmem, size = 0x10000, scoped, tag = 'output window, operand 0']
    %7 = vsyncpa [#allocation3], 0
    %s8 = scalar_lea.sflag [#allocation3], 1
    %9 = vsyncpa %s8, 0
    %10 = vsyncpa [#allocation6], 0
    %11 = vsyncpa [#allocation4], 0
    %s12 = scalar_lea.sflag [#allocation4], 1
    %13 = vsyncpa %s12, 0
    loop: start=0, step=1, limit=4
    $region2: #{tpu_custom_call.1} parent=1 // loop_pre_header
      _
    $region3: #{tpu_custom_call.1} parent=1 // loop_header
      %s15 = sphi 0, %s19
      %p16 = scmp.ge.s32.totalorder %s15, 4
      %s22 = sphi 0, %s34
      %s23 = sphi 0, %s30
      %s24 = sphi 0, %s22
      %s25 = sphi 0, %s23
      %s26 = sphi 0, %s24
      %s27 = sphi 0, %s25
      %s39 = sphi 0, %s41
      %s42 = sphi 0, %s39
      %s43 = sphi 0, %s42
      %s59 = sphi 0, %s43
      %s63 = sphi 0, %s63
      %s65 = sphi 0, %s63
      %s66 = sphi 0, %s65
      %s80 = sphi 0, %s66
      %s88 = sphi 0, %s90
      %s91 = sphi 0, %s88
      %s92 = sphi 0, %s91
      %s108 = sphi 0, %s92
    $region4: #{tpu_custom_call.1} parent=1 // loop_header_branch
      %18 = sbr.rel (%p16) target = $region8
    $region5: #{tpu_custom_call.1} parent=1 // loop_body
      %s20 = ssub.s32 %s15, 1
      %s21 = ssub.s32 %s15, 2
      %s28 = sadd.s32 1, %s23
      %p29 = scmp.ge.s32.totalorder %s28, 1
      %s30 = scalar_select %p29, 0, %s28
      %s31 = sadd.s32 1, %s22
      %s32 = scalar_select %p29, %s31, %s22
      %p33 = scmp.ge.s32.totalorder %s32, 2
      %s34 = scalar_select %p33, 0, %s32
      %s35 = ssub.s32 %s22, %s34
      %s36 = ssub.s32 %s23, %s30
      %s37 = sor.u32 %s35, %s36
      %p38 = scmp.eq.s32.totalorder %s37, 0
      %s40 = sadd.s32 %s39, 1
      %s41 = scalar_select %p38, %s39, %s40
      %p44 = pneg %p38
      %p45 = scmp.eq.s32.totalorder %s15, 1
      %p46 = por %p44, %p45
      %p47 = scmp.ne.s32.totalorder %s39, %s42
      %p48 = scmp.eq.s32.totalorder %s15, 0
      %p49 = por %p47, %p48
      %p50 = scmp.ne.s32.totalorder %s39, %s42
      %p51 = scmp.eq.s32.totalorder %s20, 1
      %p52 = por %p50, %p51
      %p53 = scmp.ne.s32.totalorder %s42, %s43
      %p54 = scmp.eq.s32.totalorder %s20, 0
      %p55 = por %p53, %p54
      %p56 = scmp.ne.s32.totalorder %s42, %s43
      %p57 = scmp.eq.s32.totalorder %s21, 1
      %p58 = por %p56, %p57
      %p60 = scmp.ne.s32.totalorder %s43, %s59
      %p61 = scmp.eq.s32.totalorder %s21, 0
      %p62 = por %p60, %p61
      %s64 = sadd.s32 %s63, 1
      %p67 = scmp.eq.s32.totalorder %s15, 1
      %p68 = scmp.ne.s32.totalorder %s63, %s65
      %p69 = scmp.eq.s32.totalorder %s15, 0
      %p70 = por %p68, %p69
      %p71 = scmp.ne.s32.totalorder %s63, %s65
      %p72 = scmp.eq.s32.totalorder %s20, 1
      %p73 = por %p71, %p72
      %p74 = scmp.ne.s32.totalorder %s65, %s66
      %p75 = scmp.eq.s32.totalorder %s20, 0
      %p76 = por %p74, %p75
      %p77 = scmp.ne.s32.totalorder %s65, %s66
      %p78 = scmp.eq.s32.totalorder %s21, 1
      %p79 = por %p77, %p78
      %p81 = scmp.ne.s32.totalorder %s66, %s80
      %p82 = scmp.eq.s32.totalorder %s21, 0
      %p83 = por %p81, %p82
      %s84 = ssub.s32 %s22, %s34
      %s85 = ssub.s32 %s23, %s30
      %s86 = sor.u32 %s84, %s85
      %p87 = scmp.eq.s32.totalorder %s86, 0
      %s89 = sadd.s32 %s88, 1
      %s90 = scalar_select %p87, %s88, %s89
      %p93 = pneg %p87
      %p94 = scmp.eq.s32.totalorder %s15, 1
      %p95 = por %p93, %p94
      %p96 = scmp.ne.s32.totalorder %s88, %s91
      %p97 = scmp.eq.s32.totalorder %s15, 0
      %p98 = por %p96, %p97
      %p99 = scmp.ne.s32.totalorder %s88, %s91
      %p100 = scmp.eq.s32.totalorder %s20, 1
      %p101 = por %p99, %p100
      %p102 = scmp.ne.s32.totalorder %s91, %s92
      %p103 = scmp.eq.s32.totalorder %s20, 0
      %p104 = por %p102, %p103
      %p105 = scmp.ne.s32.totalorder %s91, %s92
      %p106 = scmp.eq.s32.totalorder %s21, 1
      %p107 = por %p105, %p106
      %p109 = scmp.ne.s32.totalorder %s92, %s108
      %p110 = scmp.eq.s32.totalorder %s21, 0
      %p111 = por %p109, %p110
      %p112 = scmp.le.s32.totalorder 1, %s15
      %p113 = scmp.lt.s32.totalorder %s15, 3
      %p114 = pnand %p112, %p113
      %p115 = pneg %p114
      // Predicated region
      $region9: #{tpu_custom_call.1} parent=5 // pred_check
        _
      $region10: #{tpu_custom_call.1} parent=5 // pred_check_branch
        %117 = sbr.rel (%p114) target = $region12
      $region11: #{tpu_custom_call.1} parent=5 // pred_region
        %s118 = ssub.s32 %s15, 1
        // Predicated region
        $region13: #{tpu_custom_call.1} parent=11 // pred_check
          %p119 = pneg %p76
        $region14: #{tpu_custom_call.1} parent=11 // pred_check_branch
          %121 = sbr.rel (%p119) target = $region16
        $region15: #{tpu_custom_call.1} parent=11 // pred_region
          %123 = vsyncadd [#allocation6], 0
          %s124 = sshll.u32 %s1, 4
          %s125 = int_to_ptr.hbm [resolvable:$true] %s124
          %s126 = sshll.u32 [#allocation5], 4
          %s127 = int_to_ptr.vmem [resolvable:$true] %s126
          %132 = dma.hbm_to_vmem [thread:$0]  %s125, 512, %s127, [#allocation6], 128, 128, 8
        $region16: #{tpu_custom_call.1} parent=11 // pred_fallthru
          _
      $region12: #{tpu_custom_call.1} parent=5 // pred_fallthru
        _
      %p133 = scmp.lt.s32.totalorder %s15, 2
      // Predicated region
      $region17: #{tpu_custom_call.1} parent=5 // pred_check
        %p134 = pneg %p133
      $region18: #{tpu_custom_call.1} parent=5 // pred_check_branch
        %136 = sbr.rel (%p134) target = $region20
      $region19: #{tpu_custom_call.1} parent=5 // pred_region
        // Predicated region
        $region21: #{tpu_custom_call.1} parent=19 // pred_check
          %p137 = pneg %p49
        $region22: #{tpu_custom_call.1} parent=19 // pred_check_branch
          %139 = sbr.rel (%p137) target = $region24
        $region23: #{tpu_custom_call.1} parent=19 // pred_region
          %s140 = sand.u32 %s39, 1
          %s141 = scalar_lea.sflag [#allocation3], %s140
          %s142 = sand.u32 %s39, 1
          %s143 = smul.addr %s142, 64
          %s144 = scalar_lea.vmem [#allocation2], %s143
          %s145 = smul.u32 4, %s23
          %147 = vsyncadd %s141, 0
          %s148 = smul.addr %s145, 2
          %s149 = smul.addr %s22, 8
          %s150 = sadd.s32 %s148, %s149
          %s151 = smul.addr %s150, 8
          %s152 = scalar_lea.hbm %s0, %s151
          %s153 = sshll.u32 %s152, 4
          %s154 = int_to_ptr.hbm [resolvable:$true] %s153
          %s155 = sshll.u32 %s144, 4
          %s156 = int_to_ptr.vmem [resolvable:$true] %s155
          %161 = dma.hbm_to_vmem [thread:$0]  %s154, 1024, %s156, %s141, 128, 128, 8
        $region24: #{tpu_custom_call.1} parent=19 // pred_fallthru
          _
      $region20: #{tpu_custom_call.1} parent=5 // pred_fallthru
        _
      %p162 = scmp.le.s32.totalorder 1, %s15
      %p163 = scmp.lt.s32.totalorder %s15, 3
      %p164 = pnand %p162, %p163
      %p165 = pneg %p164
      // Predicated region
      $region25: #{tpu_custom_call.1} parent=5 // pred_check
        _
      $region26: #{tpu_custom_call.1} parent=5 // pred_check_branch
        %167 = sbr.rel (%p164) target = $region28
      $region27: #{tpu_custom_call.1} parent=5 // pred_region
        %s168 = ssub.s32 %s15, 1
        %s169 = sand.u32 %s42, 1
        %s170 = scalar_lea.sflag [#allocation3], %s169
        %s171 = sand.u32 %s42, 1
        %s172 = smul.addr %s171, 64
        %s173 = scalar_lea.vmem [#allocation2], %s172
        // Predicated region
        $region29: #{tpu_custom_call.1} parent=27 // pred_check
          %p174 = pneg %p55
        $region30: #{tpu_custom_call.1} parent=27 // pred_check_branch
          %176 = sbr.rel (%p174) target = $region32
        $region31: #{tpu_custom_call.1} parent=27 // pred_region
          %178 = dma.done %s170, 1024
        $region32: #{tpu_custom_call.1} parent=27 // pred_fallthru
          _
        // Predicated region
        $region33: #{tpu_custom_call.1} parent=27 // pred_check
          %p179 = pneg %p76
        $region34: #{tpu_custom_call.1} parent=27 // pred_check_branch
          %181 = sbr.rel (%p179) target = $region36
        $region35: #{tpu_custom_call.1} parent=27 // pred_region
          %183 = dma.done [#allocation6], 512
        $region36: #{tpu_custom_call.1} parent=27 // pred_fallthru
          _
        %s184 = sand.u32 %s42, 1
        %s185 = scalar_lea.sflag [#allocation3], %s184
        %s186 = sand.u32 %s42, 1
        %s187 = smul.addr %s186, 64
        %s188 = scalar_lea.vmem [#allocation2], %s187
        %p189 = pneg %p55
        %p190 = pneg %p52
        %p191 = pneg %p76
        %p192 = pneg %p73
        %p193 = pneg %p104
        %p194 = pneg %p101
        %s195 = sand.u32 %s91, 1
        %s196 = scalar_lea.sflag [#allocation4], %s195
        %s197 = sand.u32 %s91, 1
        %s198 = smul.addr %s197, 64
        %s199 = scalar_lea.vmem [#allocation7], %s198
        %s200 = smul.u32 4, %s25
        %s201 = smul.u32 4, %s25
        %v202 = vld [vmem:[%s173] sm:$0xff]
        %v203 = vld [vmem:[%s173 + $0x8] sm:$0xff]
        %v204 = vld [vmem:[%s173 + $0x10] sm:$0xff]
        %v205 = vld [vmem:[%s173 + $0x18] sm:$0xff]
        %v206 = vld [vmem:[%s173 + $0x20] sm:$0xff]
        %v207 = vld [vmem:[%s173 + $0x28] sm:$0xff]
        %v208 = vld [vmem:[%s173 + $0x30] sm:$0xff]
        %v209 = vld [vmem:[%s173 + $0x38] sm:$0xff]
        %v210 = vld [vmem:[#allocation5] sm:$0xff]
        %v211 = vld [vmem:[#allocation5 + $0x8] sm:$0xff]
        %v212 = vld [vmem:[#allocation5 + $0x10] sm:$0xff]
        %v213 = vld [vmem:[#allocation5 + $0x18] sm:$0xff]
        %vm214 = vcmask 261120
        %v216 = vsel %vm214, %v202, 0
        %v219 = vsel %vm214, %v203, 0
        %v222 = vsel %vm214, %v204, 0
        %v225 = vsel %vm214, %v205, 0
        %v228 = vsel %vm214, %v206, 0
        %v231 = vsel %vm214, %v207, 0
        %v234 = vsel %vm214, %v208, 0
        %v237 = vsel %vm214, %v209, 0
        %239 = vmatpush.msra.mxu0 0.0
        %240 = vmatpush.msra.mxu0 0.0
        %241 = vmatpush.msra.mxu0 0.0
        %242 = vmatpush.msra.mxu0 0.0
        %243 = vmatpush.msra.mxu0 0.0
        %244 = vmatpush.msra.mxu0 0.0
        %245 = vmatpush.msra.mxu0 0.0
        %246 = vmatpush.msra.mxu0 0.0
        %247 = vmatpush.msra.mxu0 0.0
        %248 = vmatpush.msra.mxu0 0.0
        %249 = vmatpush.msra.mxu0 0.0
        %250 = vmatpush.msra.mxu0 0.0
        %251 = vmatpush.msra.mxu0 %v213
        %252 = vmatpush.msra.mxu0 %v212
        %253 = vmatpush.msra.mxu0 %v211
        %254 = vmatpush.msra.mxu0 %v210
        %255 = vmatmul.f32.gmra.mxu0 %v216
        %v256 = vpop.f32.mrf.mxu0
        %v257 = vadd.f32 0.0, %v256
        %258 = vmatmul.f32.gmra.mxu0 %v219
        %v259 = vpop.f32.mrf.mxu0
        %v260 = vadd.f32 0.0, %v259
        %261 = vmatmul.f32.gmra.mxu0 %v222
        %v262 = vpop.f32.mrf.mxu0
        %v263 = vadd.f32 0.0, %v262
        %264 = vmatmul.f32.gmra.mxu0 %v225
        %v265 = vpop.f32.mrf.mxu0
        %v266 = vadd.f32 0.0, %v265
        %267 = vmatmul.f32.gmra.mxu0 %v228
        %v268 = vpop.f32.mrf.mxu0
        %v269 = vadd.f32 0.0, %v268
        %270 = vmatmul.f32.gmra.mxu0 %v231
        %v271 = vpop.f32.mrf.mxu0
        %v272 = vadd.f32 0.0, %v271
        %273 = vmatmul.f32.gmra.mxu0 %v234
        %v274 = vpop.f32.mrf.mxu0
        %v275 = vadd.f32 0.0, %v274
        %276 = vmatmul.f32.gmra.mxu0 %v237
        %v277 = vpop.f32.mrf.mxu0
        %v278 = vadd.f32 0.0, %v277
        %279 = vdwg.mxu0
        %288 = vrot.lane.b32.xlu0 %v257, 112
        %v289 = vpop.permute.xlu0 %288
        %290 = vrot.lane.b32.xlu0 %v260, 112
        %v291 = vpop.permute.xlu0 %290
        %292 = vrot.lane.b32.xlu0 %v263, 112
        %v293 = vpop.permute.xlu0 %292
        %294 = vrot.lane.b32.xlu0 %v266, 112
        %v295 = vpop.permute.xlu0 %294
        %296 = vrot.lane.b32.xlu0 %v269, 112
        %v297 = vpop.permute.xlu0 %296
        %298 = vrot.lane.b32.xlu0 %v272, 112
        %v299 = vpop.permute.xlu0 %298
        %300 = vrot.lane.b32.xlu0 %v275, 112
        %v301 = vpop.permute.xlu0 %300
        %302 = vrot.lane.b32.xlu0 %v278, 112
        %v303 = vpop.permute.xlu0 %302
        %vm304 = vcmask 130048
        %v305 = vsel %vm304, %v257, 0
        %v307 = vsel %vm304, %v260, 0
        %v309 = vsel %vm304, %v263, 0
        %v311 = vsel %vm304, %v266, 0
        %v313 = vsel %vm304, %v269, 0
        %v315 = vsel %vm304, %v272, 0
        %v317 = vsel %vm304, %v275, 0
        %v319 = vsel %vm304, %v278, 0
        %v321 = vsel %vm304, %v289, 0
        %v323 = vsel %vm304, %v291, 0
        %v325 = vsel %vm304, %v293, 0
        %v327 = vsel %vm304, %v295, 0
        %v329 = vsel %vm304, %v297, 0
        %v331 = vsel %vm304, %v299, 0
        %v333 = vsel %vm304, %v301, 0
        %v335 = vsel %vm304, %v303, 0
        %337 = vmatpush.xpose.msra.mxu0 0.0
        %338 = vmatpush.xpose.msra.mxu0 0.0
        %339 = vmatpush.xpose.msra.mxu0 0.0
        %340 = vmatpush.xpose.msra.mxu0 0.0
        %341 = vmatpush.xpose.msra.mxu0 0.0
        %342 = vmatpush.xpose.msra.mxu0 0.0
        %343 = vmatpush.xpose.msra.mxu0 0.0
        %344 = vmatpush.xpose.msra.mxu0 0.0
        %345 = vmatpush.xpose.msra.mxu0 %v335
        %346 = vmatpush.xpose.msra.mxu0 %v333
        %347 = vmatpush.xpose.msra.mxu0 %v331
        %348 = vmatpush.xpose.msra.mxu0 %v329
        %349 = vmatpush.xpose.msra.mxu0 %v327
        %350 = vmatpush.xpose.msra.mxu0 %v325
        %351 = vmatpush.xpose.msra.mxu0 %v323
        %352 = vmatpush.xpose.msra.mxu0 %v321
        %353 = vmatmul.f32.gmra.mxu0 %v305
        %v354 = vpop.f32.mrf.mxu0
        %v355 = vadd.f32 0.0, %v354
        %356 = vmatmul.f32.gmra.mxu0 %v307
        %v357 = vpop.f32.mrf.mxu0
        %v358 = vadd.f32 0.0, %v357
        %359 = vmatmul.f32.gmra.mxu0 %v309
        %v360 = vpop.f32.mrf.mxu0
        %v361 = vadd.f32 0.0, %v360
        %362 = vmatmul.f32.gmra.mxu0 %v311
        %v363 = vpop.f32.mrf.mxu0
        %v364 = vadd.f32 0.0, %v363
        %365 = vmatmul.f32.gmra.mxu0 %v313
        %v366 = vpop.f32.mrf.mxu0
        %v367 = vadd.f32 0.0, %v366
        %368 = vmatmul.f32.gmra.mxu0 %v315
        %v369 = vpop.f32.mrf.mxu0
        %v370 = vadd.f32 0.0, %v369
        %371 = vmatmul.f32.gmra.mxu0 %v317
        %v372 = vpop.f32.mrf.mxu0
        %v373 = vadd.f32 0.0, %v372
        %374 = vmatmul.f32.gmra.mxu0 %v319
        %v375 = vpop.f32.mrf.mxu0
        %v376 = vadd.f32 0.0, %v375
        %377 = vdwg.mxu0
        %380 = vrot.lane.b32.xlu0 %v361, 112
        %v381 = vpop.permute.xlu0 %380
        %382 = vrot.lane.b32.xlu0 %v364, 112
        %v383 = vpop.permute.xlu0 %382
        %388 = vrot.lane.b32.xlu0 %v367, 96
        %v389 = vpop.permute.xlu0 %388
        %390 = vrot.lane.b32.xlu0 %v370, 96
        %v391 = vpop.permute.xlu0 %390
        %396 = vrot.lane.b32.xlu0 %v373, 80
        %v397 = vpop.permute.xlu0 %396
        %398 = vrot.lane.b32.xlu0 %v376, 80
        %v399 = vpop.permute.xlu0 %398
        %v402 = vmax.f32 %v355, 0.0
        %v403 = vmax.f32 %v358, 0.0
        %v404 = vmax.f32 %v381, 0.0
        %v405 = vmax.f32 %v383, 0.0
        %v406 = vmax.f32 %v389, 0.0
        %v407 = vmax.f32 %v391, 0.0
        %v408 = vmax.f32 %v397, 0.0
        %v409 = vmax.f32 %v399, 0.0
        %v410 = vsel %vm304, %v402, -inf
        %411 = vmax.xlane.f32.xlu0 %v410
        %v412 = vpop.xlane.xlu0 %411
        %v413 = vsel %vm304, %v403, -inf
        %414 = vmax.xlane.f32.xlu0 %v413
        %v415 = vpop.xlane.xlu0 %414
        %v416 = vsel %vm304, %v404, -inf
        %417 = vmax.xlane.f32.xlu0 %v416
        %v418 = vpop.xlane.xlu0 %417
        %v419 = vsel %vm304, %v405, -inf
        %420 = vmax.xlane.f32.xlu0 %v419
        %v421 = vpop.xlane.xlu0 %420
        %v422 = vsel %vm304, %v406, -inf
        %423 = vmax.xlane.f32.xlu0 %v422
        %v424 = vpop.xlane.xlu0 %423
        %v425 = vsel %vm304, %v407, -inf
        %426 = vmax.xlane.f32.xlu0 %v425
        %v427 = vpop.xlane.xlu0 %426
        %v428 = vsel %vm304, %v408, -inf
        %429 = vmax.xlane.f32.xlu0 %v428
        %v430 = vpop.xlane.xlu0 %429
        %v431 = vsel %vm304, %v409, -inf
        %432 = vmax.xlane.f32.xlu0 %v431
        %v433 = vpop.xlane.xlu0 %432
        %vm434 = vcmp.eq.f32.partialorder %v402, %v412
        %vm435 = vcmp.eq.f32.partialorder %v403, %v415
        %vm436 = vcmp.eq.f32.partialorder %v404, %v418
        %vm437 = vcmp.eq.f32.partialorder %v405, %v421
        %vm438 = vcmp.eq.f32.partialorder %v406, %v424
        %vm439 = vcmp.eq.f32.partialorder %v407, %v427
        %vm440 = vcmp.eq.f32.partialorder %v408, %v430
        %vm441 = vcmp.eq.f32.partialorder %v409, %v433
        %vm442 = vcmp.lt.f32.partialorder 0.0, 4.0
        %v443 = vsel %vm442, %v412, 0.0
        %v444 = vsel %vm442, %v415, 0.0
        %v445 = vsel %vm442, %v418, 0.0
        %v446 = vsel %vm442, %v421, 0.0
        %v447 = vsel %vm442, %v424, 0.0
        %v448 = vsel %vm442, %v427, 0.0
        %v449 = vsel %vm442, %v430, 0.0
        %v450 = vsel %vm442, %v433, 0.0
        %v451 = vsel %vm434, 1, 0
        %v452 = vsel %vm435, 1, 0
        %v453 = vsel %vm436, 1, 0
        %v454 = vsel %vm437, 1, 0
        %v455 = vsel %vm438, 1, 0
        %v456 = vsel %vm439, 1, 0
        %v457 = vsel %vm440, 1, 0
        %v458 = vsel %vm441, 1, 0
        %v459 = vcvt.s32.f32 %v451
        %v460 = vcvt.s32.f32 %v452
        %v461 = vcvt.s32.f32 %v453
        %v462 = vcvt.s32.f32 %v454
        %v463 = vcvt.s32.f32 %v455
        %v464 = vcvt.s32.f32 %v456
        %v465 = vcvt.s32.f32 %v457
        %v466 = vcvt.s32.f32 %v458
        %v467 = vsel %vm304, %v459, 0.0
        %468 = vadd.xlane.f32.xlu0 %v467
        %v469 = vpop.xlane.xlu0 %468
        %v470 = vsel %vm304, %v460, 0.0
        %471 = vadd.xlane.f32.xlu0 %v470
        %v472 = vpop.xlane.xlu0 %471
        %v473 = vsel %vm304, %v461, 0.0
        %474 = vadd.xlane.f32.xlu0 %v473
        %v475 = vpop.xlane.xlu0 %474
        %v476 = vsel %vm304, %v462, 0.0
        %477 = vadd.xlane.f32.xlu0 %v476
        %v478 = vpop.xlane.xlu0 %477
        %v479 = vsel %vm304, %v463, 0.0
        %480 = vadd.xlane.f32.xlu0 %v479
        %v481 = vpop.xlane.xlu0 %480
        %v482 = vsel %vm304, %v464, 0.0
        %483 = vadd.xlane.f32.xlu0 %v482
        %v484 = vpop.xlane.xlu0 %483
        %v485 = vsel %vm304, %v465, 0.0
        %486 = vadd.xlane.f32.xlu0 %v485
        %v487 = vpop.xlane.xlu0 %486
        %v488 = vsel %vm304, %v466, 0.0
        %489 = vadd.xlane.f32.xlu0 %v488
        %v490 = vpop.xlane.xlu0 %489
        %v491 = vadd.f32 %v469, 0.0
        %v492 = vadd.f32 %v472, 0.0
        %v493 = vadd.f32 %v475, 0.0
        %v494 = vadd.f32 %v478, 0.0
        %v495 = vadd.f32 %v481, 0.0
        %v496 = vadd.f32 %v484, 0.0
        %v497 = vadd.f32 %v487, 0.0
        %v498 = vadd.f32 %v490, 0.0
        %v499 = vsel %vm434, -inf, %v402
        %v500 = vsel %vm435, -inf, %v403
        %v501 = vsel %vm436, -inf, %v404
        %v502 = vsel %vm437, -inf, %v405
        %v503 = vsel %vm438, -inf, %v406
        %v504 = vsel %vm439, -inf, %v407
        %v505 = vsel %vm440, -inf, %v408
        %v506 = vsel %vm441, -inf, %v409
        %v507 = vsel %vm304, %v499, -inf
        %508 = vmax.xlane.f32.xlu0 %v507
        %v509 = vpop.xlane.xlu0 %508
        %v510 = vsel %vm304, %v500, -inf
        %511 = vmax.xlane.f32.xlu0 %v510
        %v512 = vpop.xlane.xlu0 %511
        %v513 = vsel %vm304, %v501, -inf
        %514 = vmax.xlane.f32.xlu0 %v513
        %v515 = vpop.xlane.xlu0 %514
        %v516 = vsel %vm304, %v502, -inf
        %517 = vmax.xlane.f32.xlu0 %v516
        %v518 = vpop.xlane.xlu0 %517
        %v519 = vsel %vm304, %v503, -inf
        %520 = vmax.xlane.f32.xlu0 %v519
        %v521 = vpop.xlane.xlu0 %520
        %v522 = vsel %vm304, %v504, -inf
        %523 = vmax.xlane.f32.xlu0 %v522
        %v524 = vpop.xlane.xlu0 %523
        %v525 = vsel %vm304, %v505, -inf
        %526 = vmax.xlane.f32.xlu0 %v525
        %v527 = vpop.xlane.xlu0 %526
        %v528 = vsel %vm304, %v506, -inf
        %529 = vmax.xlane.f32.xlu0 %v528
        %v530 = vpop.xlane.xlu0 %529
        %vm531 = vcmp.eq.f32.partialorder %v499, %v509
        %vm532 = vcmp.eq.f32.partialorder %v500, %v512
        %vm533 = vcmp.eq.f32.partialorder %v501, %v515
        %vm534 = vcmp.eq.f32.partialorder %v502, %v518
        %vm535 = vcmp.eq.f32.partialorder %v503, %v521
        %vm536 = vcmp.eq.f32.partialorder %v504, %v524
        %vm537 = vcmp.eq.f32.partialorder %v505, %v527
        %vm538 = vcmp.eq.f32.partialorder %v506, %v530
        %vm539 = vcmp.lt.f32.partialorder %v491, 4.0
        %vm540 = vcmp.lt.f32.partialorder %v492, 4.0
        %vm541 = vcmp.lt.f32.partialorder %v493, 4.0
        %vm542 = vcmp.lt.f32.partialorder %v494, 4.0
        %vm543 = vcmp.lt.f32.partialorder %v495, 4.0
        %vm544 = vcmp.lt.f32.partialorder %v496, 4.0
        %vm545 = vcmp.lt.f32.partialorder %v497, 4.0
        %vm546 = vcmp.lt.f32.partialorder %v498, 4.0
        %v547 = vsel %vm539, %v509, %v443
        %v548 = vsel %vm540, %v512, %v444
        %v549 = vsel %vm541, %v515, %v445
        %v550 = vsel %vm542, %v518, %v446
        %v551 = vsel %vm543, %v521, %v447
        %v552 = vsel %vm544, %v524, %v448
        %v553 = vsel %vm545, %v527, %v449
        %v554 = vsel %vm546, %v530, %v450
        %v555 = vsel %vm531, 1, 0
        %v556 = vsel %vm532, 1, 0
        %v557 = vsel %vm533, 1, 0
        %v558 = vsel %vm534, 1, 0
        %v559 = vsel %vm535, 1, 0
        %v560 = vsel %vm536, 1, 0
        %v561 = vsel %vm537, 1, 0
        %v562 = vsel %vm538, 1, 0
        %v563 = vcvt.s32.f32 %v555
        %v564 = vcvt.s32.f32 %v556
        %v565 = vcvt.s32.f32 %v557
        %v566 = vcvt.s32.f32 %v558
        %v567 = vcvt.s32.f32 %v559
        %v568 = vcvt.s32.f32 %v560
        %v569 = vcvt.s32.f32 %v561
        %v570 = vcvt.s32.f32 %v562
        %v571 = vsel %vm304, %v563, 0.0
        %572 = vadd.xlane.f32.xlu0 %v571
        %v573 = vpop.xlane.xlu0 %572
        %v574 = vsel %vm304, %v564, 0.0
        %575 = vadd.xlane.f32.xlu0 %v574
        %v576 = vpop.xlane.xlu0 %575
        %v577 = vsel %vm304, %v565, 0.0
        %578 = vadd.xlane.f32.xlu0 %v577
        %v579 = vpop.xlane.xlu0 %578
        %v580 = vsel %vm304, %v566, 0.0
        %581 = vadd.xlane.f32.xlu0 %v580
        %v582 = vpop.xlane.xlu0 %581
        %v583 = vsel %vm304, %v567, 0.0
        %584 = vadd.xlane.f32.xlu0 %v583
        %v585 = vpop.xlane.xlu0 %584
        %v586 = vsel %vm304, %v568, 0.0
        %587 = vadd.xlane.f32.xlu0 %v586
        %v588 = vpop.xlane.xlu0 %587
        %v589 = vsel %vm304, %v569, 0.0
        %590 = vadd.xlane.f32.xlu0 %v589
        %v591 = vpop.xlane.xlu0 %590
        %v592 = vsel %vm304, %v570, 0.0
        %593 = vadd.xlane.f32.xlu0 %v592
        %v594 = vpop.xlane.xlu0 %593
        %v595 = vadd.f32 %v491, %v573
        %v596 = vadd.f32 %v492, %v576
        %v597 = vadd.f32 %v493, %v579
        %v598 = vadd.f32 %v494, %v582
        %v599 = vadd.f32 %v495, %v585
        %v600 = vadd.f32 %v496, %v588
        %v601 = vadd.f32 %v497, %v591
        %v602 = vadd.f32 %v498, %v594
        %v603 = vsel %vm531, -inf, %v499
        %v604 = vsel %vm532, -inf, %v500
        %v605 = vsel %vm533, -inf, %v501
        %v606 = vsel %vm534, -inf, %v502
        %v607 = vsel %vm535, -inf, %v503
        %v608 = vsel %vm536, -inf, %v504
        %v609 = vsel %vm537, -inf, %v505
        %v610 = vsel %vm538, -inf, %v506
        %v611 = vsel %vm304, %v603, -inf
        %612 = vmax.xlane.f32.xlu0 %v611
        %v613 = vpop.xlane.xlu0 %612
        %v614 = vsel %vm304, %v604, -inf
        %615 = vmax.xlane.f32.xlu0 %v614
        %v616 = vpop.xlane.xlu0 %615
        %v617 = vsel %vm304, %v605, -inf
        %618 = vmax.xlane.f32.xlu0 %v617
        %v619 = vpop.xlane.xlu0 %618
        %v620 = vsel %vm304, %v606, -inf
        %621 = vmax.xlane.f32.xlu0 %v620
        %v622 = vpop.xlane.xlu0 %621
        %v623 = vsel %vm304, %v607, -inf
        %624 = vmax.xlane.f32.xlu0 %v623
        %v625 = vpop.xlane.xlu0 %624
        %v626 = vsel %vm304, %v608, -inf
        %627 = vmax.xlane.f32.xlu0 %v626
        %v628 = vpop.xlane.xlu0 %627
        %v629 = vsel %vm304, %v609, -inf
        %630 = vmax.xlane.f32.xlu0 %v629
        %v631 = vpop.xlane.xlu0 %630
        %v632 = vsel %vm304, %v610, -inf
        %633 = vmax.xlane.f32.xlu0 %v632
        %v634 = vpop.xlane.xlu0 %633
        %vm635 = vcmp.eq.f32.partialorder %v603, %v613
        %vm636 = vcmp.eq.f32.partialorder %v604, %v616
        %vm637 = vcmp.eq.f32.partialorder %v605, %v619
        %vm638 = vcmp.eq.f32.partialorder %v606, %v622
        %vm639 = vcmp.eq.f32.partialorder %v607, %v625
        %vm640 = vcmp.eq.f32.partialorder %v608, %v628
        %vm641 = vcmp.eq.f32.partialorder %v609, %v631
        %vm642 = vcmp.eq.f32.partialorder %v610, %v634
        %vm643 = vcmp.lt.f32.partialorder %v595, 4.0
        %vm644 = vcmp.lt.f32.partialorder %v596, 4.0
        %vm645 = vcmp.lt.f32.partialorder %v597, 4.0
        %vm646 = vcmp.lt.f32.partialorder %v598, 4.0
        %vm647 = vcmp.lt.f32.partialorder %v599, 4.0
        %vm648 = vcmp.lt.f32.partialorder %v600, 4.0
        %vm649 = vcmp.lt.f32.partialorder %v601, 4.0
        %vm650 = vcmp.lt.f32.partialorder %v602, 4.0
        %v651 = vsel %vm643, %v613, %v547
        %v652 = vsel %vm644, %v616, %v548
        %v653 = vsel %vm645, %v619, %v549
        %v654 = vsel %vm646, %v622, %v550
        %v655 = vsel %vm647, %v625, %v551
        %v656 = vsel %vm648, %v628, %v552
        %v657 = vsel %vm649, %v631, %v553
        %v658 = vsel %vm650, %v634, %v554
        %v659 = vsel %vm635, 1, 0
        %v660 = vsel %vm636, 1, 0
        %v661 = vsel %vm637, 1, 0
        %v662 = vsel %vm638, 1, 0
        %v663 = vsel %vm639, 1, 0
        %v664 = vsel %vm640, 1, 0
        %v665 = vsel %vm641, 1, 0
        %v666 = vsel %vm642, 1, 0
        %v667 = vcvt.s32.f32 %v659
        %v668 = vcvt.s32.f32 %v660
        %v669 = vcvt.s32.f32 %v661
        %v670 = vcvt.s32.f32 %v662
        %v671 = vcvt.s32.f32 %v663
        %v672 = vcvt.s32.f32 %v664
        %v673 = vcvt.s32.f32 %v665
        %v674 = vcvt.s32.f32 %v666
        %v675 = vsel %vm304, %v667, 0.0
        %676 = vadd.xlane.f32.xlu0 %v675
        %v677 = vpop.xlane.xlu0 %676
        %v678 = vsel %vm304, %v668, 0.0
        %679 = vadd.xlane.f32.xlu0 %v678
        %v680 = vpop.xlane.xlu0 %679
        %v681 = vsel %vm304, %v669, 0.0
        %682 = vadd.xlane.f32.xlu0 %v681
        %v683 = vpop.xlane.xlu0 %682
        %v684 = vsel %vm304, %v670, 0.0
        %685 = vadd.xlane.f32.xlu0 %v684
        %v686 = vpop.xlane.xlu0 %685
        %v687 = vsel %vm304, %v671, 0.0
        %688 = vadd.xlane.f32.xlu0 %v687
        %v689 = vpop.xlane.xlu0 %688
        %v690 = vsel %vm304, %v672, 0.0
        %691 = vadd.xlane.f32.xlu0 %v690
        %v692 = vpop.xlane.xlu0 %691
        %v693 = vsel %vm304, %v673, 0.0
        %694 = vadd.xlane.f32.xlu0 %v693
        %v695 = vpop.xlane.xlu0 %694
        %v696 = vsel %vm304, %v674, 0.0
        %697 = vadd.xlane.f32.xlu0 %v696
        %v698 = vpop.xlane.xlu0 %697
        %v699 = vadd.f32 %v595, %v677
        %v700 = vadd.f32 %v596, %v680
        %v701 = vadd.f32 %v597, %v683
        %v702 = vadd.f32 %v598, %v686
        %v703 = vadd.f32 %v599, %v689
        %v704 = vadd.f32 %v600, %v692
        %v705 = vadd.f32 %v601, %v695
        %v706 = vadd.f32 %v602, %v698
        %v707 = vsel %vm635, -inf, %v603
        %v708 = vsel %vm636, -inf, %v604
        %v709 = vsel %vm637, -inf, %v605
        %v710 = vsel %vm638, -inf, %v606
        %v711 = vsel %vm639, -inf, %v607
        %v712 = vsel %vm640, -inf, %v608
        %v713 = vsel %vm641, -inf, %v609
        %v714 = vsel %vm642, -inf, %v610
        %v715 = vsel %vm304, %v707, -inf
        %716 = vmax.xlane.f32.xlu0 %v715
        %v717 = vpop.xlane.xlu0 %716
        %v718 = vsel %vm304, %v708, -inf
        %719 = vmax.xlane.f32.xlu0 %v718
        %v720 = vpop.xlane.xlu0 %719
        %v721 = vsel %vm304, %v709, -inf
        %722 = vmax.xlane.f32.xlu0 %v721
        %v723 = vpop.xlane.xlu0 %722
        %v724 = vsel %vm304, %v710, -inf
        %725 = vmax.xlane.f32.xlu0 %v724
        %v726 = vpop.xlane.xlu0 %725
        %v727 = vsel %vm304, %v711, -inf
        %728 = vmax.xlane.f32.xlu0 %v727
        %v729 = vpop.xlane.xlu0 %728
        %v730 = vsel %vm304, %v712, -inf
        %731 = vmax.xlane.f32.xlu0 %v730
        %v732 = vpop.xlane.xlu0 %731
        %v733 = vsel %vm304, %v713, -inf
        %734 = vmax.xlane.f32.xlu0 %v733
        %v735 = vpop.xlane.xlu0 %734
        %v736 = vsel %vm304, %v714, -inf
        %737 = vmax.xlane.f32.xlu0 %v736
        %v738 = vpop.xlane.xlu0 %737
        %vm739 = vcmp.lt.f32.partialorder %v699, 4.0
        %vm740 = vcmp.lt.f32.partialorder %v700, 4.0
        %vm741 = vcmp.lt.f32.partialorder %v701, 4.0
        %vm742 = vcmp.lt.f32.partialorder %v702, 4.0
        %vm743 = vcmp.lt.f32.partialorder %v703, 4.0
        %vm744 = vcmp.lt.f32.partialorder %v704, 4.0
        %vm745 = vcmp.lt.f32.partialorder %v705, 4.0
        %vm746 = vcmp.lt.f32.partialorder %v706, 4.0
        %v747 = vsel %vm739, %v717, %v651
        %v748 = vsel %vm740, %v720, %v652
        %v749 = vsel %vm741, %v723, %v653
        %v750 = vsel %vm742, %v726, %v654
        %v751 = vsel %vm743, %v729, %v655
        %v752 = vsel %vm744, %v732, %v656
        %v753 = vsel %vm745, %v735, %v657
        %v754 = vsel %vm746, %v738, %v658
        %vm755 = vcmp.ge.f32.partialorder %v402, %v747
        %vm756 = vcmp.ge.f32.partialorder %v403, %v748
        %vm757 = vcmp.ge.f32.partialorder %v404, %v749
        %vm758 = vcmp.ge.f32.partialorder %v405, %v750
        %vm759 = vcmp.ge.f32.partialorder %v406, %v751
        %vm760 = vcmp.ge.f32.partialorder %v407, %v752
        %vm761 = vcmp.ge.f32.partialorder %v408, %v753
        %vm762 = vcmp.ge.f32.partialorder %v409, %v754
        %vm763 = vcmp.gt.f32.partialorder %v402, 0.0
        %vm764 = vcmp.gt.f32.partialorder %v403, 0.0
        %vm765 = vcmp.gt.f32.partialorder %v404, 0.0
        %vm766 = vcmp.gt.f32.partialorder %v405, 0.0
        %vm767 = vcmp.gt.f32.partialorder %v406, 0.0
        %vm768 = vcmp.gt.f32.partialorder %v407, 0.0
        %vm769 = vcmp.gt.f32.partialorder %v408, 0.0
        %vm770 = vcmp.gt.f32.partialorder %v409, 0.0
        %vm771 = vmand %vm755, %vm763
        %vm772 = vmand %vm756, %vm764
        %vm773 = vmand %vm757, %vm765
        %vm774 = vmand %vm758, %vm766
        %vm775 = vmand %vm759, %vm767
        %vm776 = vmand %vm760, %vm768
        %vm777 = vmand %vm761, %vm769
        %vm778 = vmand %vm762, %vm770
        %v779 = vsel %vm771, %v402, 0.0
        %v780 = vsel %vm772, %v403, 0.0
        %v781 = vsel %vm773, %v404, 0.0
        %v782 = vsel %vm774, %v405, 0.0
        %v783 = vsel %vm775, %v406, 0.0
        %v784 = vsel %vm776, %v407, 0.0
        %v785 = vsel %vm777, %v408, 0.0
        %v786 = vsel %vm778, %v409, 0.0
        %v787 = vsel %vm304, %v779, -inf
        %788 = vmax.xlane.f32.xlu0 %v787
        %v789 = vpop.xlane.xlu0 %788
        %v790 = vsel %vm304, %v780, -inf
        %791 = vmax.xlane.f32.xlu0 %v790
        %v792 = vpop.xlane.xlu0 %791
        %v793 = vsel %vm304, %v781, -inf
        %794 = vmax.xlane.f32.xlu0 %v793
        %v795 = vpop.xlane.xlu0 %794
        %v796 = vsel %vm304, %v782, -inf
        %797 = vmax.xlane.f32.xlu0 %v796
        %v798 = vpop.xlane.xlu0 %797
        %v799 = vsel %vm304, %v783, -inf
        %800 = vmax.xlane.f32.xlu0 %v799
        %v801 = vpop.xlane.xlu0 %800
        %v802 = vsel %vm304, %v784, -inf
        %803 = vmax.xlane.f32.xlu0 %v802
        %v804 = vpop.xlane.xlu0 %803
        %v805 = vsel %vm304, %v785, -inf
        %806 = vmax.xlane.f32.xlu0 %v805
        %v807 = vpop.xlane.xlu0 %806
        %v808 = vsel %vm304, %v786, -inf
        %809 = vmax.xlane.f32.xlu0 %v808
        %v810 = vpop.xlane.xlu0 %809
        %v811 = vsub.f32 %v779, %v789
        %v812 = vsub.f32 %v780, %v792
        %v813 = vsub.f32 %v781, %v795
        %v814 = vsub.f32 %v782, %v798
        %v815 = vsub.f32 %v783, %v801
        %v816 = vsub.f32 %v784, %v804
        %v817 = vsub.f32 %v785, %v807
        %v818 = vsub.f32 %v786, %v810
        %v819 = vmul.f32 %v811, 1.442695
        %v820 = vpow.pop %v819
        %v821 = vmul.f32 %v812, 1.442695
        %v822 = vpow.pop %v821
        %v823 = vmul.f32 %v813, 1.442695
        %v824 = vpow.pop %v823
        %v825 = vmul.f32 %v814, 1.442695
        %v826 = vpow.pop %v825
        %v827 = vmul.f32 %v815, 1.442695
        %v828 = vpow.pop %v827
        %v829 = vmul.f32 %v816, 1.442695
        %v830 = vpow.pop %v829
        %v831 = vmul.f32 %v817, 1.442695
        %v832 = vpow.pop %v831
        %v833 = vmul.f32 %v818, 1.442695
        %v834 = vpow.pop %v833
        %v835 = vsel %vm771, 1, 0
        %v836 = vsel %vm772, 1, 0
        %v837 = vsel %vm773, 1, 0
        %v838 = vsel %vm774, 1, 0
        %v839 = vsel %vm775, 1, 0
        %v840 = vsel %vm776, 1, 0
        %v841 = vsel %vm777, 1, 0
        %v842 = vsel %vm778, 1, 0
        %v843 = vcvt.s32.f32 %v835
        %v844 = vcvt.s32.f32 %v836
        %v845 = vcvt.s32.f32 %v837
        %v846 = vcvt.s32.f32 %v838
        %v847 = vcvt.s32.f32 %v839
        %v848 = vcvt.s32.f32 %v840
        %v849 = vcvt.s32.f32 %v841
        %v850 = vcvt.s32.f32 %v842
        %v851 = vmul.f32 %v820, %v843
        %v852 = vmul.f32 %v822, %v844
        %v853 = vmul.f32 %v824, %v845
        %v854 = vmul.f32 %v826, %v846
        %v855 = vmul.f32 %v828, %v847
        %v856 = vmul.f32 %v830, %v848
        %v857 = vmul.f32 %v832, %v849
        %v858 = vmul.f32 %v834, %v850
        %v859 = vsel %vm304, %v851, 0.0
        %860 = vadd.xlane.f32.xlu0 %v859
        %v861 = vpop.xlane.xlu0 %860
        %v862 = vsel %vm304, %v852, 0.0
        %863 = vadd.xlane.f32.xlu0 %v862
        %v864 = vpop.xlane.xlu0 %863
        %v865 = vsel %vm304, %v853, 0.0
        %866 = vadd.xlane.f32.xlu0 %v865
        %v867 = vpop.xlane.xlu0 %866
        %v868 = vsel %vm304, %v854, 0.0
        %869 = vadd.xlane.f32.xlu0 %v868
        %v870 = vpop.xlane.xlu0 %869
        %v871 = vsel %vm304, %v855, 0.0
        %872 = vadd.xlane.f32.xlu0 %v871
        %v873 = vpop.xlane.xlu0 %872
        %v874 = vsel %vm304, %v856, 0.0
        %875 = vadd.xlane.f32.xlu0 %v874
        %v876 = vpop.xlane.xlu0 %875
        %v877 = vsel %vm304, %v857, 0.0
        %878 = vadd.xlane.f32.xlu0 %v877
        %v879 = vpop.xlane.xlu0 %878
        %v880 = vsel %vm304, %v858, 0.0
        %881 = vadd.xlane.f32.xlu0 %v880
        %v882 = vpop.xlane.xlu0 %881
        %v883 = vadd.f32 %v861, 1e-05
        %v884 = vadd.f32 %v864, 1e-05
        %v885 = vadd.f32 %v867, 1e-05
        %v886 = vadd.f32 %v870, 1e-05
        %v887 = vadd.f32 %v873, 1e-05
        %v888 = vadd.f32 %v876, 1e-05
        %v889 = vadd.f32 %v879, 1e-05
        %v890 = vadd.f32 %v882, 1e-05
        %v891 = vrcp.pop %v883
        %v892 = vrcp.pop %v884
        %v893 = vrcp.pop %v885
        %v894 = vrcp.pop %v886
        %v895 = vrcp.pop %v887
        %v896 = vrcp.pop %v888
        %v897 = vrcp.pop %v889
        %v898 = vrcp.pop %v890
        %v899 = vmul.f32 %v883, %v891
        %v900 = vmul.f32 %v884, %v892
        %v901 = vmul.f32 %v885, %v893
        %v902 = vmul.f32 %v886, %v894
        %v903 = vmul.f32 %v887, %v895
        %v904 = vmul.f32 %v888, %v896
        %v905 = vmul.f32 %v889, %v897
        %v906 = vmul.f32 %v890, %v898
        %v907 = vsub.f32 2.0, %v899
        %v908 = vsub.f32 2.0, %v900
        %v909 = vsub.f32 2.0, %v901
        %v910 = vsub.f32 2.0, %v902
        %v911 = vsub.f32 2.0, %v903
        %v912 = vsub.f32 2.0, %v904
        %v913 = vsub.f32 2.0, %v905
        %v914 = vsub.f32 2.0, %v906
        %v915 = vmul.f32 %v891, %v907
        %v916 = vmul.f32 %v892, %v908
        %v917 = vmul.f32 %v893, %v909
        %v918 = vmul.f32 %v894, %v910
        %v919 = vmul.f32 %v895, %v911
        %v920 = vmul.f32 %v896, %v912
        %v921 = vmul.f32 %v897, %v913
        %v922 = vmul.f32 %v898, %v914
        %v923 = vmul.f32 %v851, %v915
        %v924 = vmul.f32 %v852, %v916
        %v925 = vmul.f32 %v853, %v917
        %v926 = vmul.f32 %v854, %v918
        %v927 = vmul.f32 %v855, %v919
        %v928 = vmul.f32 %v856, %v920
        %v929 = vmul.f32 %v857, %v921
        %v930 = vmul.f32 %v858, %v922
        %931 = vst.msk [vmem:[%s199] sm:$0xff] %vm304, %v923
        %932 = vst.msk [vmem:[%s199 + $0x8] sm:$0xff] %vm304, %v924
        %933 = vst.msk [vmem:[%s199 + $0x10] sm:$0xff] %vm304, %v925
        %934 = vst.msk [vmem:[%s199 + $0x18] sm:$0xff] %vm304, %v926
        %935 = vst.msk [vmem:[%s199 + $0x20] sm:$0xff] %vm304, %v927
        %936 = vst.msk [vmem:[%s199 + $0x28] sm:$0xff] %vm304, %v928
        %937 = vst.msk [vmem:[%s199 + $0x30] sm:$0xff] %vm304, %v929
        %938 = vst.msk [vmem:[%s199 + $0x38] sm:$0xff] %vm304, %v930
        %s939 = sand.u32 %s91, 1
        %s940 = scalar_lea.sflag [#allocation4], %s939
        %s941 = sand.u32 %s91, 1
        %s942 = smul.addr %s941, 64
        %s943 = scalar_lea.vmem [#allocation7], %s942
        // Predicated region
        $region37: #{tpu_custom_call.1} parent=27 // pred_check
          %p944 = pneg %p101
        $region38: #{tpu_custom_call.1} parent=27 // pred_check_branch
          %946 = sbr.rel (%p944) target = $region40
        $region39: #{tpu_custom_call.1} parent=27 // pred_region
          %s947 = smul.u32 4, %s25
          %949 = vsyncadd %s940, 0
          %s950 = smul.addr %s947, 2
          %s951 = smul.addr %s24, 8
          %s952 = sadd.s32 %s950, %s951
          %s953 = smul.addr %s952, 8
          %s954 = scalar_lea.hbm %s2, %s953
          %s955 = sshll.u32 %s943, 4
          %s956 = int_to_ptr.vmem [resolvable:$true] %s955
          %s957 = sshll.u32 %s954, 4
          %s958 = int_to_ptr.hbm [resolvable:$true] %s957
          %963 = dma.vmem_to_hbm [thread:$0]  %s956, 1024, %s958, %s940, 128, 128, 8
        $region40: #{tpu_custom_call.1} parent=27 // pred_fallthru
          _
      $region28: #{tpu_custom_call.1} parent=5 // pred_fallthru
        _
      %p964 = scmp.le.s32.totalorder 2, %s15
      // Predicated region
      $region41: #{tpu_custom_call.1} parent=5 // pred_check
        %p965 = pneg %p964
      $region42: #{tpu_custom_call.1} parent=5 // pred_check_branch
        %967 = sbr.rel (%p965) target = $region44
      $region43: #{tpu_custom_call.1} parent=5 // pred_region
        %s968 = ssub.s32 %s15, 2
        // Predicated region
        $region45: #{tpu_custom_call.1} parent=43 // pred_check
          %p969 = pneg %p107
        $region46: #{tpu_custom_call.1} parent=43 // pred_check_branch
          %971 = sbr.rel (%p969) target = $region48
        $region47: #{tpu_custom_call.1} parent=43 // pred_region
          %s972 = sand.u32 %s92, 1
          %s973 = scalar_lea.sflag [#allocation4], %s972
          %s974 = sand.u32 %s92, 1
          %s975 = smul.addr %s974, 64
          %s976 = scalar_lea.vmem [#allocation7], %s975
          %978 = dma.done %s973, 1024
        $region48: #{tpu_custom_call.1} parent=43 // pred_fallthru
          _
      $region44: #{tpu_custom_call.1} parent=5 // pred_fallthru
        _
    $region6: #{tpu_custom_call.1} parent=1 // loop_footer
      %s19 = sadd.s32 1, %s15
    $region7: #{tpu_custom_call.1} parent=1 // loop_footer_branch
      %14 = sbr.rel target = $region3
    $region8: #{tpu_custom_call.1} parent=1 // loop_exit
      _
    %979 = vsyncpa [#allocation3], 1
    %s980 = scalar_lea.sflag [#allocation3], 1
    %981 = vsyncpa %s980, 1
    %982 = vsyncpa [#allocation6], 1
    %983 = vsyncpa [#allocation4], 1
    %s984 = scalar_lea.sflag [#allocation4], 1
    %985 = vsyncpa %s984, 1

</llo_original>
